<compile_context>
chip_gen: v7x
topology: tpu7x:2x2x1
jax: 0.10.0
libtpu: 0.0.40
codegen_flags: <defaults>
</compile_context>

<pallas_src>
import functools

import jax
import jax.numpy as jnp
import numpy as np
from jax.experimental import pallas as pl
from jax.experimental.pallas import tpu as pltpu


def _round_up(v, m):
    return (v + m - 1) // m * m


def _neg_sum_kernel(xc_ref, lc_ref, xr_ref, lr_ref, out_ref, *, inv_t, n, tn):
    """Accumulate neg_sum over column blocks for one row block.

    xc_ref / lc_ref: (TM, 1) f32 / i32   column-layout slice of x / labels
    xr_ref / lr_ref: (1, TN) f32 / i32   row-layout slice of x / labels
    out_ref:         (TM, 1) f32         per-row negative sum (resident over j)
    """
    j = pl.program_id(1)

    @pl.when(j == 0)
    def _():
        out_ref[...] = jnp.zeros_like(out_ref)

    # sim_ij = x_i * x_j / T ; scale the (TM,1) column once, not the full tile.
    sim = (xc_ref[...] * inv_t) * xr_ref[...]                    # (TM, TN)

    # Mask out same-label pairs (this also removes the diagonal, since
    # label_i == label_i) and padded columns beyond the true length n.
    eq = lc_ref[...] == lr_ref[...]                              # (TM, TN)
    col_ids = jax.lax.broadcasted_iota(jnp.int32, (1, tn), 1) + j * tn
    mask = jnp.logical_or(eq, col_ids >= n)                      # (TM, TN)

    contrib = jnp.where(mask, 0.0, jnp.exp(sim))                 # one select, EUP exp
    # TODO(synk): if a bundle dump shows the row reduction (XLU) saturated, use
    # jnp.dot(contrib, ones((TN, 1)), preferred_element_type=f32) on the idle MXU.
    out_ref[...] += jnp.sum(contrib, axis=1, keepdims=True)      # (TM, 1)


def _neg_sum(x, labels_full, n, inv_t, *, tile=512):
    """neg_sum_i = sum_j [label_i != label_j] * exp(x_i * x_j / T)."""
    n_pad = _round_up(n, 128)
    tile = min(tile, n_pad)
    n_pad = _round_up(n_pad, tile)
    pad = n_pad - n

    xp = jnp.pad(x.astype(jnp.float32), (0, pad))
    lp = jnp.pad(labels_full.astype(jnp.int32), (0, pad), constant_values=-1)

    # Feed x / labels in both layouts so the kernel never re-lays-out a lane
    # vector into a column (wrapper-side reshape is a free DMA layout choice).
    x_col, l_col = xp.reshape(n_pad, 1), lp.reshape(n_pad, 1)
    x_row, l_row = xp.reshape(1, n_pad), lp.reshape(1, n_pad)

    grid = (n_pad // tile, n_pad // tile)
    out = pl.pallas_call(
        functools.partial(_neg_sum_kernel, inv_t=inv_t, n=n, tn=tile),
        out_shape=jax.ShapeDtypeStruct((n_pad, 1), jnp.float32),
        grid=grid,
        in_specs=[
            pl.BlockSpec((tile, 1), lambda i, j: (i, 0)),
            pl.BlockSpec((tile, 1), lambda i, j: (i, 0)),
            pl.BlockSpec((1, tile), lambda i, j: (0, j)),
            pl.BlockSpec((1, tile), lambda i, j: (0, j)),
        ],
        out_specs=pl.BlockSpec((tile, 1), lambda i, j: (i, 0)),
        compiler_params=pltpu.CompilerParams(
            dimension_semantics=("parallel", "arbitrary"),
            vmem_limit_bytes=16 << 20,  # ~3 live (tile,tile) f32 tiles + small vectors
        ),
    )(x_col, l_col, x_row, l_row)
    return out[:n, 0]


def supcon_loss_v2(x1, x2, labels1=None, labels2=None, temperature=0.1):
    """Pallas/JAX equivalent of SupConLoss_v2.forward."""
    b, size = x1.shape
    rows = jnp.concatenate([x1, x2], axis=0).astype(jnp.float32)       # (2B, size)
    if labels1 is not None:
        if labels2 is None:  # the PyTorch reference would crash here; be forgiving
            labels2 = labels1
        labels = jnp.concatenate([labels1, labels2]).astype(jnp.int32)
    else:
        labels = jnp.tile(jnp.arange(b, dtype=jnp.int32), 2)           # (2B,)

    x = rows.reshape(-1)                                                # (N,)
    labels_full = jnp.repeat(labels, size)                              # (N,)
    n = 2 * b * size
    inv_t = 1.0 / float(temperature)

    # ---- Positive-pair term: O(N) algebra (only a tiny (2B,2B) label matrix). ----
    row_sum = rows.sum(axis=1)                                          # (2B,)
    same = (labels[:, None] == labels[None, :]).astype(jnp.float32)     # (2B, 2B)
    s_row = same @ row_sum                                              # same-label sum
    cnt_row = same.sum(axis=1) * float(size)                            # same-label count
    s_elem = jnp.repeat(s_row, size)                                    # (N,)
    p_count = jnp.repeat(cnt_row, size) - 1.0                           # (N,)
    pos_sum = (x * inv_t) * (s_elem - x)             # == sum_j sim_ij * p_mask_ij

    # ---- Negative-pair term: O(N^2), tiled Pallas kernel. ----
    neg_sum = _neg_sum(x, labels_full, n, inv_t)                        # (N,)

    # loss_i = -( sum_j(sim*p_mask)/p_count - log(neg_sum_i) )
    row_loss = -(pos_sum / p_count - jnp.log(neg_sum))
    row_loss = jnp.where(p_count > 0, row_loss, 0.0)  # matches the isnan->0 fixup
    return jnp.mean(row_loss)


def _reference_numpy(x1, x2, temperature=0.1):
    x1 = np.asarray(x1, dtype=np.float64)
    x2 = np.asarray(x2, dtype=np.float64)
    b, size = x1.shape
    x = np.concatenate([x1, x2], axis=0).reshape(-1, 1)
    sim = (x @ x.T) / temperature
    labels = np.tile(np.arange(b), 2)
    labels = np.repeat(labels, size)
    p_mask = (labels[:, None] == labels[None, :]).astype(np.float64)
    p_mask -= np.eye(p_mask.shape[0])
    n_mask = (labels[:, None] != labels[None, :]).astype(np.float64)
    pos_sim = sim * p_mask
    neg_sum = (np.exp(sim) * n_mask).sum(1, keepdims=True)
    loss = pos_sim - np.log(neg_sum)
    loss = -((loss * p_mask).sum(1) / p_mask.sum(1))
    loss = np.where(np.isnan(loss), 0.0, loss)
    return loss.mean()


if __name__ == "__main__":
    key = jax.random.PRNGKey(0)
    k1, k2 = jax.random.split(key)
    B, SIZE = 2, 16                       # N = 2*B*SIZE = 64
    x1 = jax.random.normal(k1, (B, SIZE), dtype=jnp.float32)
    x2 = jax.random.normal(k2, (B, SIZE), dtype=jnp.float32)

    loss = supcon_loss_v2(x1, x2, temperature=0.1)
    loss = jax.block_until_ready(loss)

    ref = _reference_numpy(x1, x2, temperature=0.1)
    np.testing.assert_allclose(np.asarray(loss), ref, rtol=5e-4, atol=5e-4)
    print("KERNEL_OK")
</pallas_src>

<mosaic_0001>
module attributes {stable_mosaic.version = 11 : i64} {
  func.func @_neg_sum_kernel(%arg0: i32, %arg1: i32, %arg2: memref<128x1xf32, #tpu.memory_space<vmem>>, %arg3: memref<128x1xi32, #tpu.memory_space<vmem>>, %arg4: memref<1x128xf32, #tpu.memory_space<vmem>>, %arg5: memref<1x128xi32, #tpu.memory_space<vmem>>, %arg6: memref<128x1xf32, #tpu.memory_space<vmem>>) attributes {dimension_semantics = [#tpu.dimension_semantics<parallel>, #tpu.dimension_semantics<arbitrary>], iteration_bounds = array<i64: 1, 1>, scalar_prefetch = 0 : i64, scratch_operands = 0 : i64, tpu.core_type = #tpu.core_type<tc>, window_params = [{transform_indices = @transform_0, window_bounds = array<i64: 128, 1>}, {transform_indices = @transform_1, window_bounds = array<i64: 128, 1>}, {transform_indices = @transform_2, window_bounds = array<i64: 1, 128>}, {transform_indices = @transform_3, window_bounds = array<i64: 1, 128>}, {transform_indices = @transform_4, window_bounds = array<i64: 128, 1>}]} {
    %c0_i32 = arith.constant 0 : i32
    %0 = arith.cmpi eq, %arg1, %c0_i32 : i32
    %1 = arith.extui %0 : i1 to i32
    %c0_i32_0 = arith.constant 0 : i32
    %2 = arith.cmpi ne, %1, %c0_i32_0 : i32
    scf.if %2 {
      %cst_14 = arith.constant 0.000000e+00 : f32
      %31 = vector.broadcast %cst_14 : f32 to vector<128x1xf32>
      %c0_15 = arith.constant 0 : index
      %c0_16 = arith.constant 0 : index
      %32 = vector.load %arg6[%c0_15, %c0_16] : memref<128x1xf32, #tpu.memory_space<vmem>>, vector<128x1xf32>
      tpu.vector_store %arg6[%c0_15, %c0_16], %31 {strides = array<i32>} : memref<128x1xf32, #tpu.memory_space<vmem>>, vector<128x1xf32>,
    } else {
    }
    %c0 = arith.constant 0 : index
    %c0_1 = arith.constant 0 : index
    %3 = vector.load %arg2[%c0, %c0_1] : memref<128x1xf32, #tpu.memory_space<vmem>>, vector<128x1xf32>
    %cst = arith.constant 1.000000e+01 : f32
    %4 = vector.broadcast %cst : f32 to vector<128x1xf32>
    %5 = arith.mulf %3, %4 : vector<128x1xf32>
    %c0_2 = arith.constant 0 : index
    %c0_3 = arith.constant 0 : index
    %6 = vector.load %arg4[%c0_2, %c0_3] : memref<1x128xf32, #tpu.memory_space<vmem>>, vector<1x128xf32>
    %7 = vector.broadcast %5 : vector<128x1xf32> to vector<128x128xf32>
    %8 = vector.broadcast %6 : vector<1x128xf32> to vector<128x128xf32>
    %9 = arith.mulf %7, %8 : vector<128x128xf32>
    %c0_4 = arith.constant 0 : index
    %c0_5 = arith.constant 0 : index
    %10 = vector.load %arg3[%c0_4, %c0_5] : memref<128x1xi32, #tpu.memory_space<vmem>>, vector<128x1xi32>
    %c0_6 = arith.constant 0 : index
    %c0_7 = arith.constant 0 : index
    %11 = vector.load %arg5[%c0_6, %c0_7] : memref<1x128xi32, #tpu.memory_space<vmem>>, vector<1x128xi32>
    %12 = vector.broadcast %10 : vector<128x1xi32> to vector<128x128xi32>
    %13 = vector.broadcast %11 : vector<1x128xi32> to vector<128x128xi32>
    %14 = arith.cmpi eq, %12, %13 : vector<128x128xi32>
    %15 = tpu.iota {dimensions = array<i32: 1>} : vector<1x128xi32>
    %c128_i32 = arith.constant 128 : i32
    %16 = arith.muli %arg1, %c128_i32 : i32
    %17 = vector.broadcast %16 : i32 to vector<1x128xi32>
    %18 = arith.addi %15, %17 : vector<1x128xi32>
    %c64_i32 = arith.constant 64 : i32
    %19 = vector.broadcast %c64_i32 : i32 to vector<1x128xi32>
    %20 = arith.cmpi sge, %18, %19 : vector<1x128xi32>
    %21 = vector.broadcast %20 : vector<1x128xi1> to vector<128x128xi1>
    %22 = arith.ori %14, %21 : vector<128x128xi1>
    %23 = math.exp %9 : vector<128x128xf32>
    %cst_8 = arith.constant 0.000000e+00 : f32
    %24 = vector.broadcast %cst_8 : f32 to vector<128x128xf32>
    %25 = arith.select %22, %24, %23 : vector<128x128xi1>, vector<128x128xf32>
    %c0_9 = arith.constant 0 : index
    %c0_10 = arith.constant 0 : index
    %26 = vector.load %arg6[%c0_9, %c0_10] : memref<128x1xf32, #tpu.memory_space<vmem>>, vector<128x1xf32>
    %cst_11 = arith.constant dense<0.000000e+00> : vector<128xf32>
    %27 = vector.multi_reduction <add>, %25, %cst_11 [1] : vector<128x128xf32> to vector<128xf32>
    %28 = vector.shape_cast %27 : vector<128xf32> to vector<128x1xf32>
    %29 = arith.addf %26, %28 : vector<128x1xf32>
    %c0_12 = arith.constant 0 : index
    %c0_13 = arith.constant 0 : index
    %30 = vector.load %arg6[%c0_12, %c0_13] : memref<128x1xf32, #tpu.memory_space<vmem>>, vector<128x1xf32>
    tpu.vector_store %arg6[%c0_12, %c0_13], %29 {strides = array<i32>} : memref<128x1xf32, #tpu.memory_space<vmem>>, vector<128x1xf32>,
    return
  }
  func.func @transform_0(%arg0: i32, %arg1: i32) -> (i32, i32) {
    %c0_i32 = arith.constant 0 : i32
    %c0_i32_0 = arith.constant 0 : i32
    return %arg0, %c0_i32 : i32, i32
  }
  func.func @transform_1(%arg0: i32, %arg1: i32) -> (i32, i32) {
    %c0_i32 = arith.constant 0 : i32
    %c0_i32_0 = arith.constant 0 : i32
    return %arg0, %c0_i32 : i32, i32
  }
  func.func @transform_2(%arg0: i32, %arg1: i32) -> (i32, i32) {
    %c0_i32 = arith.constant 0 : i32
    %c0_i32_0 = arith.constant 0 : i32
    return %c0_i32, %arg1 : i32, i32
  }
  func.func @transform_3(%arg0: i32, %arg1: i32) -> (i32, i32) {
    %c0_i32 = arith.constant 0 : i32
    %c0_i32_0 = arith.constant 0 : i32
    return %c0_i32, %arg1 : i32, i32
  }
  func.func @transform_4(%arg0: i32, %arg1: i32) -> (i32, i32) {
    %c0_i32 = arith.constant 0 : i32
    %c0_i32_0 = arith.constant 0 : i32
    return %arg0, %c0_i32 : i32, i32
  }
}

</mosaic_0001>

<llo_original>
// kernel: tpu_custom_call.1
$region0: #{tpu_custom_call.1}
  #allocation0 [shape = 'u32[]', space=smem, size = 0x4, offset = 0x4, fixed_abs, tag = 'smem constant byte address 0x4 - core index']
  #allocation1 [shape = 'u32[144,128]{1,0:T(1,128)}', space=vmem, size = 0x12000, scoped, tag = 'internal scratch']
  %s0 = inlined_call_operand.vmem [shape: f32[128,1], index: 0, kind: input, shape index: {}]
  %s1 = inlined_call_operand.vmem [shape: s32[128,1], index: 1, kind: input, shape index: {}]
  %s2 = inlined_call_operand.vmem [shape: f32[1,128], index: 2, kind: input, shape index: {}]
  %s3 = inlined_call_operand.vmem [shape: s32[1,128], index: 3, kind: input, shape index: {}]
  %s4 = inlined_call_operand.vmem [shape: f32[128,1], index: 4, kind: output, shape index: {}]
  %s5 = sld [smem:[#allocation0]]
  $region30: #{tpu_custom_call.1} parent=0
    _
  %s7 = ssub.s32 1, %s5
  %s8 = scalar_select 0, %s7, %s5
  // Predicated region
  $region2: #{tpu_custom_call.1} parent=0 // pred_check
    _
  $region3: #{tpu_custom_call.1} parent=0 // pred_check_branch
    %10 = sbr.rel (0) target = $region5
  $region4: #{tpu_custom_call.1} parent=0 // pred_region
    _
  $region5: #{tpu_custom_call.1} parent=0 // pred_fallthru
    _
  // Predicated region
  $region6: #{tpu_custom_call.1} parent=0 // pred_check
    _
  $region7: #{tpu_custom_call.1} parent=0 // pred_check_branch
    %12 = sbr.rel (0) target = $region9
  $region8: #{tpu_custom_call.1} parent=0 // pred_region
    _
  $region9: #{tpu_custom_call.1} parent=0 // pred_fallthru
    _
  // Predicated region
  $region10: #{tpu_custom_call.1} parent=0 // pred_check
    _
  $region11: #{tpu_custom_call.1} parent=0 // pred_check_branch
    %14 = sbr.rel (0) target = $region13
  $region12: #{tpu_custom_call.1} parent=0 // pred_region
    _
  $region13: #{tpu_custom_call.1} parent=0 // pred_fallthru
    _
  // Predicated region
  $region14: #{tpu_custom_call.1} parent=0 // pred_check
    _
  $region15: #{tpu_custom_call.1} parent=0 // pred_check_branch
    %16 = sbr.rel (0) target = $region17
  $region16: #{tpu_custom_call.1} parent=0 // pred_region
    _
  $region17: #{tpu_custom_call.1} parent=0 // pred_fallthru
    _
  %p17 = scmp.eq.s32.totalorder 0, 0
  // Predicated region
  $region18: #{tpu_custom_call.1} parent=0 // pred_check
    %p18 = pneg %p17
  $region19: #{tpu_custom_call.1} parent=0 // pred_check_branch
    %20 = sbr.rel (%p18) target = $region21
  $region20: #{tpu_custom_call.1} parent=0 // pred_region
    %vm21 = vcmask 7168
    %22 = vst.msk [vmem:[%s4] sm:$0xff] %vm21, 0.0
    %23 = vst.msk [vmem:[%s4 + $0x8] sm:$0xff] %vm21, 0.0
    %24 = vst.msk [vmem:[%s4 + $0x10] sm:$0xff] %vm21, 0.0
    %25 = vst.msk [vmem:[%s4 + $0x18] sm:$0xff] %vm21, 0.0
    %26 = vst.msk [vmem:[%s4 + $0x20] sm:$0xff] %vm21, 0.0
    %27 = vst.msk [vmem:[%s4 + $0x28] sm:$0xff] %vm21, 0.0
    %28 = vst.msk [vmem:[%s4 + $0x30] sm:$0xff] %vm21, 0.0
    %29 = vst.msk [vmem:[%s4 + $0x38] sm:$0xff] %vm21, 0.0
    %30 = vst.msk [vmem:[%s4 + $0x40] sm:$0xff] %vm21, 0.0
    %31 = vst.msk [vmem:[%s4 + $0x48] sm:$0xff] %vm21, 0.0
    %32 = vst.msk [vmem:[%s4 + $0x50] sm:$0xff] %vm21, 0.0
    %33 = vst.msk [vmem:[%s4 + $0x58] sm:$0xff] %vm21, 0.0
    %34 = vst.msk [vmem:[%s4 + $0x60] sm:$0xff] %vm21, 0.0
    %35 = vst.msk [vmem:[%s4 + $0x68] sm:$0xff] %vm21, 0.0
    %36 = vst.msk [vmem:[%s4 + $0x70] sm:$0xff] %vm21, 0.0
    %37 = vst.msk [vmem:[%s4 + $0x78] sm:$0xff] %vm21, 0.0
  $region21: #{tpu_custom_call.1} parent=0 // pred_fallthru
    _
  %v38 = vld [vmem:[%s0] sm:$0xff]
  %v39 = vld [vmem:[%s0 + $0x8] sm:$0xff]
  %v40 = vld [vmem:[%s0 + $0x10] sm:$0xff]
  %v41 = vld [vmem:[%s0 + $0x18] sm:$0xff]
  %v42 = vld [vmem:[%s0 + $0x20] sm:$0xff]
  %v43 = vld [vmem:[%s0 + $0x28] sm:$0xff]
  %v44 = vld [vmem:[%s0 + $0x30] sm:$0xff]
  %v45 = vld [vmem:[%s0 + $0x38] sm:$0xff]
  %v46 = vld [vmem:[%s0 + $0x40] sm:$0xff]
  %v47 = vld [vmem:[%s0 + $0x48] sm:$0xff]
  %v48 = vld [vmem:[%s0 + $0x50] sm:$0xff]
  %v49 = vld [vmem:[%s0 + $0x58] sm:$0xff]
  %v50 = vld [vmem:[%s0 + $0x60] sm:$0xff]
  %v51 = vld [vmem:[%s0 + $0x68] sm:$0xff]
  %v52 = vld [vmem:[%s0 + $0x70] sm:$0xff]
  %v53 = vld [vmem:[%s0 + $0x78] sm:$0xff]
  %v54 = vmul.f32 %v38, 10.0
  %v55 = vmul.f32 %v39, 10.0
  %v56 = vmul.f32 %v40, 10.0
  %v57 = vmul.f32 %v41, 10.0
  %v58 = vmul.f32 %v42, 10.0
  %v59 = vmul.f32 %v43, 10.0
  %v60 = vmul.f32 %v44, 10.0
  %v61 = vmul.f32 %v45, 10.0
  %v62 = vmul.f32 %v46, 10.0
  %v63 = vmul.f32 %v47, 10.0
  %v64 = vmul.f32 %v48, 10.0
  %v65 = vmul.f32 %v49, 10.0
  %v66 = vmul.f32 %v50, 10.0
  %v67 = vmul.f32 %v51, 10.0
  %v68 = vmul.f32 %v52, 10.0
  %v69 = vmul.f32 %v53, 10.0
  %v70 = vld [vmem:[%s2] sm:$0x1]
  %72 = vset.pattern.permute.xlu0 0
  %73 = vperm.xlu0 %72, %v54
  %v74 = vpop.permute.xlu0 %73
  %77 = vset.pattern.permute.xlu0 0
  %78 = vperm.xlu0 %77, %v55
  %v79 = vpop.permute.xlu0 %78
  %82 = vset.pattern.permute.xlu0 0
  %83 = vperm.xlu0 %82, %v56
  %v84 = vpop.permute.xlu0 %83
  %87 = vset.pattern.permute.xlu0 0
  %88 = vperm.xlu0 %87, %v57
  %v89 = vpop.permute.xlu0 %88
  %92 = vset.pattern.permute.xlu0 0
  %93 = vperm.xlu0 %92, %v58
  %v94 = vpop.permute.xlu0 %93
  %97 = vset.pattern.permute.xlu0 0
  %98 = vperm.xlu0 %97, %v59
  %v99 = vpop.permute.xlu0 %98
  %102 = vset.pattern.permute.xlu0 0
  %103 = vperm.xlu0 %102, %v60
  %v104 = vpop.permute.xlu0 %103
  %107 = vset.pattern.permute.xlu0 0
  %108 = vperm.xlu0 %107, %v61
  %v109 = vpop.permute.xlu0 %108
  %112 = vset.pattern.permute.xlu0 0
  %113 = vperm.xlu0 %112, %v62
  %v114 = vpop.permute.xlu0 %113
  %117 = vset.pattern.permute.xlu0 0
  %118 = vperm.xlu0 %117, %v63
  %v119 = vpop.permute.xlu0 %118
  %122 = vset.pattern.permute.xlu0 0
  %123 = vperm.xlu0 %122, %v64
  %v124 = vpop.permute.xlu0 %123
  %127 = vset.pattern.permute.xlu0 0
  %128 = vperm.xlu0 %127, %v65
  %v129 = vpop.permute.xlu0 %128
  %132 = vset.pattern.permute.xlu0 0
  %133 = vperm.xlu0 %132, %v66
  %v134 = vpop.permute.xlu0 %133
  %137 = vset.pattern.permute.xlu0 0
  %138 = vperm.xlu0 %137, %v67
  %v139 = vpop.permute.xlu0 %138
  %142 = vset.pattern.permute.xlu0 0
  %143 = vperm.xlu0 %142, %v68
  %v144 = vpop.permute.xlu0 %143
  %147 = vset.pattern.permute.xlu0 0
  %148 = vperm.xlu0 %147, %v69
  %v149 = vpop.permute.xlu0 %148
  %v152 = vlaneseq
  %v153 = vshrl.u32 %v152, 7
  %v154 = vsub.s32 0, %v153
  %v155 = vrot.slane %v70, %v154
  %v157 = vmul.f32 %v74, %v155
  %v158 = vmul.f32 %v79, %v155
  %v159 = vmul.f32 %v84, %v155
  %v160 = vmul.f32 %v89, %v155
  %v161 = vmul.f32 %v94, %v155
  %v162 = vmul.f32 %v99, %v155
  %v163 = vmul.f32 %v104, %v155
  %v164 = vmul.f32 %v109, %v155
  %v165 = vmul.f32 %v114, %v155
  %v166 = vmul.f32 %v119, %v155
  %v167 = vmul.f32 %v124, %v155
  %v168 = vmul.f32 %v129, %v155
  %v169 = vmul.f32 %v134, %v155
  %v170 = vmul.f32 %v139, %v155
  %v171 = vmul.f32 %v144, %v155
  %v172 = vmul.f32 %v149, %v155
  %v173 = vld [vmem:[%s1] sm:$0xff]
  %v174 = vld [vmem:[%s1 + $0x8] sm:$0xff]
  %v175 = vld [vmem:[%s1 + $0x10] sm:$0xff]
  %v176 = vld [vmem:[%s1 + $0x18] sm:$0xff]
  %v177 = vld [vmem:[%s1 + $0x20] sm:$0xff]
  %v178 = vld [vmem:[%s1 + $0x28] sm:$0xff]
  %v179 = vld [vmem:[%s1 + $0x30] sm:$0xff]
  %v180 = vld [vmem:[%s1 + $0x38] sm:$0xff]
  %v181 = vld [vmem:[%s1 + $0x40] sm:$0xff]
  %v182 = vld [vmem:[%s1 + $0x48] sm:$0xff]
  %v183 = vld [vmem:[%s1 + $0x50] sm:$0xff]
  %v184 = vld [vmem:[%s1 + $0x58] sm:$0xff]
  %v185 = vld [vmem:[%s1 + $0x60] sm:$0xff]
  %v186 = vld [vmem:[%s1 + $0x68] sm:$0xff]
  %v187 = vld [vmem:[%s1 + $0x70] sm:$0xff]
  %v188 = vld [vmem:[%s1 + $0x78] sm:$0xff]
  %v189 = vld [vmem:[%s3] sm:$0x1]
  %190 = vset.pattern.permute.xlu0 0
  %191 = vperm.xlu0 %190, %v173
  %v192 = vpop.permute.xlu0 %191
  %193 = vset.pattern.permute.xlu0 0
  %194 = vperm.xlu0 %193, %v174
  %v195 = vpop.permute.xlu0 %194
  %196 = vset.pattern.permute.xlu0 0
  %197 = vperm.xlu0 %196, %v175
  %v198 = vpop.permute.xlu0 %197
  %199 = vset.pattern.permute.xlu0 0
  %200 = vperm.xlu0 %199, %v176
  %v201 = vpop.permute.xlu0 %200
  %202 = vset.pattern.permute.xlu0 0
  %203 = vperm.xlu0 %202, %v177
  %v204 = vpop.permute.xlu0 %203
  %205 = vset.pattern.permute.xlu0 0
  %206 = vperm.xlu0 %205, %v178
  %v207 = vpop.permute.xlu0 %206
  %208 = vset.pattern.permute.xlu0 0
  %209 = vperm.xlu0 %208, %v179
  %v210 = vpop.permute.xlu0 %209
  %211 = vset.pattern.permute.xlu0 0
  %212 = vperm.xlu0 %211, %v180
  %v213 = vpop.permute.xlu0 %212
  %214 = vset.pattern.permute.xlu0 0
  %215 = vperm.xlu0 %214, %v181
  %v216 = vpop.permute.xlu0 %215
  %217 = vset.pattern.permute.xlu0 0
  %218 = vperm.xlu0 %217, %v182
  %v219 = vpop.permute.xlu0 %218
  %220 = vset.pattern.permute.xlu0 0
  %221 = vperm.xlu0 %220, %v183
  %v222 = vpop.permute.xlu0 %221
  %223 = vset.pattern.permute.xlu0 0
  %224 = vperm.xlu0 %223, %v184
  %v225 = vpop.permute.xlu0 %224
  %226 = vset.pattern.permute.xlu0 0
  %227 = vperm.xlu0 %226, %v185
  %v228 = vpop.permute.xlu0 %227
  %229 = vset.pattern.permute.xlu0 0
  %230 = vperm.xlu0 %229, %v186
  %v231 = vpop.permute.xlu0 %230
  %232 = vset.pattern.permute.xlu0 0
  %233 = vperm.xlu0 %232, %v187
  %v234 = vpop.permute.xlu0 %233
  %235 = vset.pattern.permute.xlu0 0
  %236 = vperm.xlu0 %235, %v188
  %v237 = vpop.permute.xlu0 %236
  %v238 = vlaneseq
  %v239 = vshrl.u32 %v238, 7
  %v240 = vsub.s32 0, %v239
  %v241 = vrot.slane %v189, %v240
  %vm242 = vcmp.eq.s32.totalorder %v192, %v241
  %vm243 = vcmp.eq.s32.totalorder %v195, %v241
  %vm244 = vcmp.eq.s32.totalorder %v198, %v241
  %vm245 = vcmp.eq.s32.totalorder %v201, %v241
  %vm246 = vcmp.eq.s32.totalorder %v204, %v241
  %vm247 = vcmp.eq.s32.totalorder %v207, %v241
  %vm248 = vcmp.eq.s32.totalorder %v210, %v241
  %vm249 = vcmp.eq.s32.totalorder %v213, %v241
  %vm250 = vcmp.eq.s32.totalorder %v216, %v241
  %vm251 = vcmp.eq.s32.totalorder %v219, %v241
  %vm252 = vcmp.eq.s32.totalorder %v222, %v241
  %vm253 = vcmp.eq.s32.totalorder %v225, %v241
  %vm254 = vcmp.eq.s32.totalorder %v228, %v241
  %vm255 = vcmp.eq.s32.totalorder %v231, %v241
  %vm256 = vcmp.eq.s32.totalorder %v234, %v241
  %vm257 = vcmp.eq.s32.totalorder %v237, %v241
  %v258 = vlaneseq
  %v259 = vand.u32 %v258, 127
  %s260 = smul.u32 0, 128
  %v261 = vstv %s260
  %v262 = vadd.s32 %v259, %v261
  %vm263 = vcmp.ge.s32.totalorder %v262, 64
  %v264 = vsel %vm263, 1, 0
  %vm265 = vcmp.eq.s32.totalorder %v264, 1
  %vm266 = vmor %vm242, %vm265
  %vm267 = vmor %vm243, %vm265
  %vm268 = vmor %vm244, %vm265
  %vm269 = vmor %vm245, %vm265
  %vm270 = vmor %vm246, %vm265
  %vm271 = vmor %vm247, %vm265
  %vm272 = vmor %vm248, %vm265
  %vm273 = vmor %vm249, %vm265
  %vm274 = vmor %vm250, %vm265
  %vm275 = vmor %vm251, %vm265
  %vm276 = vmor %vm252, %vm265
  %vm277 = vmor %vm253, %vm265
  %vm278 = vmor %vm254, %vm265
  %vm279 = vmor %vm255, %vm265
  %vm280 = vmor %vm256, %vm265
  %vm281 = vmor %vm257, %vm265
  %v282 = vmul.f32 %v157, 1.442695
  %v283 = vpow.pop %v282
  %v284 = vmul.f32 %v158, 1.442695
  %v285 = vpow.pop %v284
  %v286 = vmul.f32 %v159, 1.442695
  %v287 = vpow.pop %v286
  %v288 = vmul.f32 %v160, 1.442695
  %v289 = vpow.pop %v288
  %v290 = vmul.f32 %v161, 1.442695
  %v291 = vpow.pop %v290
  %v292 = vmul.f32 %v162, 1.442695
  %v293 = vpow.pop %v292
  %v294 = vmul.f32 %v163, 1.442695
  %v295 = vpow.pop %v294
  %v296 = vmul.f32 %v164, 1.442695
  %v297 = vpow.pop %v296
  %v298 = vmul.f32 %v165, 1.442695
  %v299 = vpow.pop %v298
  %v300 = vmul.f32 %v166, 1.442695
  %v301 = vpow.pop %v300
  %v302 = vmul.f32 %v167, 1.442695
  %v303 = vpow.pop %v302
  %v304 = vmul.f32 %v168, 1.442695
  %v305 = vpow.pop %v304
  %v306 = vmul.f32 %v169, 1.442695
  %v307 = vpow.pop %v306
  %v308 = vmul.f32 %v170, 1.442695
  %v309 = vpow.pop %v308
  %v310 = vmul.f32 %v171, 1.442695
  %v311 = vpow.pop %v310
  %v312 = vmul.f32 %v172, 1.442695
  %v313 = vpow.pop %v312
  %v314 = vsel %vm266, 0.0, %v283
  %v315 = vsel %vm267, 0.0, %v285
  %v316 = vsel %vm268, 0.0, %v287
  %v317 = vsel %vm269, 0.0, %v289
  %v318 = vsel %vm270, 0.0, %v291
  %v319 = vsel %vm271, 0.0, %v293
  %v320 = vsel %vm272, 0.0, %v295
  %v321 = vsel %vm273, 0.0, %v297
  %v322 = vsel %vm274, 0.0, %v299
  %v323 = vsel %vm275, 0.0, %v301
  %v324 = vsel %vm276, 0.0, %v303
  %v325 = vsel %vm277, 0.0, %v305
  %v326 = vsel %vm278, 0.0, %v307
  %v327 = vsel %vm279, 0.0, %v309
  %v328 = vsel %vm280, 0.0, %v311
  %v329 = vsel %vm281, 0.0, %v313
  %v330 = vld [vmem:[%s4] sm:$0xff]
  %v331 = vld [vmem:[%s4 + $0x8] sm:$0xff]
  %v332 = vld [vmem:[%s4 + $0x10] sm:$0xff]
  %v333 = vld [vmem:[%s4 + $0x18] sm:$0xff]
  %v334 = vld [vmem:[%s4 + $0x20] sm:$0xff]
  %v335 = vld [vmem:[%s4 + $0x28] sm:$0xff]
  %v336 = vld [vmem:[%s4 + $0x30] sm:$0xff]
  %v337 = vld [vmem:[%s4 + $0x38] sm:$0xff]
  %v338 = vld [vmem:[%s4 + $0x40] sm:$0xff]
  %v339 = vld [vmem:[%s4 + $0x48] sm:$0xff]
  %v340 = vld [vmem:[%s4 + $0x50] sm:$0xff]
  %v341 = vld [vmem:[%s4 + $0x58] sm:$0xff]
  %v342 = vld [vmem:[%s4 + $0x60] sm:$0xff]
  %v343 = vld [vmem:[%s4 + $0x68] sm:$0xff]
  %v344 = vld [vmem:[%s4 + $0x70] sm:$0xff]
  %v345 = vld [vmem:[%s4 + $0x78] sm:$0xff]
  %346 = vadd.xlane.f32.xlu0 %v314
  %v347 = vpop.xlane.xlu0 %346
  %348 = vadd.xlane.f32.xlu0 %v315
  %v349 = vpop.xlane.xlu0 %348
  %350 = vadd.xlane.f32.xlu0 %v316
  %v351 = vpop.xlane.xlu0 %350
  %352 = vadd.xlane.f32.xlu0 %v317
  %v353 = vpop.xlane.xlu0 %352
  %354 = vadd.xlane.f32.xlu0 %v318
  %v355 = vpop.xlane.xlu0 %354
  %356 = vadd.xlane.f32.xlu0 %v319
  %v357 = vpop.xlane.xlu0 %356
  %358 = vadd.xlane.f32.xlu0 %v320
  %v359 = vpop.xlane.xlu0 %358
  %360 = vadd.xlane.f32.xlu0 %v321
  %v361 = vpop.xlane.xlu0 %360
  %362 = vadd.xlane.f32.xlu0 %v322
  %v363 = vpop.xlane.xlu0 %362
  %364 = vadd.xlane.f32.xlu0 %v323
  %v365 = vpop.xlane.xlu0 %364
  %366 = vadd.xlane.f32.xlu0 %v324
  %v367 = vpop.xlane.xlu0 %366
  %368 = vadd.xlane.f32.xlu0 %v325
  %v369 = vpop.xlane.xlu0 %368
  %370 = vadd.xlane.f32.xlu0 %v326
  %v371 = vpop.xlane.xlu0 %370
  %372 = vadd.xlane.f32.xlu0 %v327
  %v373 = vpop.xlane.xlu0 %372
  %374 = vadd.xlane.f32.xlu0 %v328
  %v375 = vpop.xlane.xlu0 %374
  %376 = vadd.xlane.f32.xlu0 %v329
  %v377 = vpop.xlane.xlu0 %376
  %v378 = vadd.f32 %v330, %v347
  %v379 = vadd.f32 %v331, %v349
  %v380 = vadd.f32 %v332, %v351
  %v381 = vadd.f32 %v333, %v353
  %v382 = vadd.f32 %v334, %v355
  %v383 = vadd.f32 %v335, %v357
  %v384 = vadd.f32 %v336, %v359
  %v385 = vadd.f32 %v337, %v361
  %v386 = vadd.f32 %v338, %v363
  %v387 = vadd.f32 %v339, %v365
  %v388 = vadd.f32 %v340, %v367
  %v389 = vadd.f32 %v341, %v369
  %v390 = vadd.f32 %v342, %v371
  %v391 = vadd.f32 %v343, %v373
  %v392 = vadd.f32 %v344, %v375
  %v393 = vadd.f32 %v345, %v377
  %vm394 = vcmask 7168
  %395 = vst.msk [vmem:[%s4] sm:$0xff] %vm394, %v378
  %396 = vst.msk [vmem:[%s4 + $0x8] sm:$0xff] %vm394, %v379
  %397 = vst.msk [vmem:[%s4 + $0x10] sm:$0xff] %vm394, %v380
  %398 = vst.msk [vmem:[%s4 + $0x18] sm:$0xff] %vm394, %v381
  %399 = vst.msk [vmem:[%s4 + $0x20] sm:$0xff] %vm394, %v382
  %400 = vst.msk [vmem:[%s4 + $0x28] sm:$0xff] %vm394, %v383
  %401 = vst.msk [vmem:[%s4 + $0x30] sm:$0xff] %vm394, %v384
  %402 = vst.msk [vmem:[%s4 + $0x38] sm:$0xff] %vm394, %v385
  %403 = vst.msk [vmem:[%s4 + $0x40] sm:$0xff] %vm394, %v386
  %404 = vst.msk [vmem:[%s4 + $0x48] sm:$0xff] %vm394, %v387
  %405 = vst.msk [vmem:[%s4 + $0x50] sm:$0xff] %vm394, %v388
  %406 = vst.msk [vmem:[%s4 + $0x58] sm:$0xff] %vm394, %v389
  %407 = vst.msk [vmem:[%s4 + $0x60] sm:$0xff] %vm394, %v390
  %408 = vst.msk [vmem:[%s4 + $0x68] sm:$0xff] %vm394, %v391
  %409 = vst.msk [vmem:[%s4 + $0x70] sm:$0xff] %vm394, %v392
  %410 = vst.msk [vmem:[%s4 + $0x78] sm:$0xff] %vm394, %v393
  // Predicated region
  $region22: #{tpu_custom_call.1} parent=0 // pred_check
    _
  $region23: #{tpu_custom_call.1} parent=0 // pred_check_branch
    %412 = sbr.rel (0) target = $region25
  $region24: #{tpu_custom_call.1} parent=0 // pred_region
    _
  $region25: #{tpu_custom_call.1} parent=0 // pred_fallthru
    _
  // Predicated region
  $region26: #{tpu_custom_call.1} parent=0 // pred_check
    _
  $region27: #{tpu_custom_call.1} parent=0 // pred_check_branch
    %414 = sbr.rel (0) target = $region29
  $region28: #{tpu_custom_call.1} parent=0 // pred_region
    _
  $region29: #{tpu_custom_call.1} parent=0 // pred_fallthru
    _

</llo_original>
